<compile_context>
chip_gen: v7x
topology: tpu7x:2x2x1
jax: 0.10.0
libtpu: 0.0.40
codegen_flags: <defaults>
</compile_context>

<pallas_src>
import functools

import jax
import jax.numpy as jnp
from jax import lax
from jax.experimental import pallas as pl
from jax.experimental.pallas import tpu as pltpu


def _divita_conv_kernel(B, S, x_ref, gamma_ref, beta_ref, w_ref, cb_ref,
                        clsw_ref, clsb_ref, out_ref):
    """Whole forward pass for one (small) batch, single grid point.

    x_ref    : (B*S, F)   f32   batch*seq on sublanes, features on lanes
    gamma_ref: (1, F)     f32   BatchNorm weight
    beta_ref : (1, F)     f32   BatchNorm bias
    w_ref    : (3F, C)    bf16  conv taps stacked along K (k=0, k=1, k=2)
    cb_ref   : (1, C)     f32   conv bias
    clsw_ref : (C, 128)   bf16  classifier weight, zero-padded to lane width
    clsb_ref : (1, 128)   f32   classifier bias, zero-padded
    out_ref  : (B, 128)   f32   lane-dense output; caller slices [:, :L]
    """
    x = x_ref[...]                                             # (B*S, F)
    BS, F = x.shape

    # ---- BatchNorm1d (training-mode batch statistics, biased variance) ----
    mean = jnp.mean(x, axis=0, keepdims=True)                  # (1, F)
    var = jnp.mean((x - mean) ** 2, axis=0, keepdims=True)     # (1, F)
    inv = lax.rsqrt(var + 1e-5)
    xn = (x - mean) * inv * gamma_ref[...] + beta_ref[...]     # (B*S, F)

    # ---- Conv1d(F, C, k=3, stride=1, pad=1) as ONE fused matmul ------------
    # Build the left/right neighbour taps by rolling along the row axis and
    # zeroing the rows that correspond to sequence-edge zero padding.  The
    # roll wrap-around rows land exactly on the masked rows.
    row = lax.broadcasted_iota(jnp.int32, (BS, F), 0)
    x_dn = jnp.where(row % S == 0, 0.0, jnp.roll(xn, 1, axis=0))    # xn[s-1]
    x_up = jnp.where(row % S == S - 1, 0.0, jnp.roll(xn, -1, axis=0))  # xn[s+1]
    x3 = jnp.concatenate([x_dn, xn, x_up], axis=-1)            # (B*S, 3F)

    y = jnp.dot(x3.astype(jnp.bfloat16), w_ref[...],
                preferred_element_type=jnp.float32) + cb_ref[...]
    y = jnp.maximum(y, 0.0)                                    # ReLU, (B*S, C)

    # ---- SimpleAvg over the sequence dim: reshape + sublane reduce ---------
    h = jnp.mean(y.reshape(B, S, -1), axis=1)                  # (B, C)

    # ---- Classifier Linear(C, L), lane-padded to 128 -----------------------
    out_ref[...] = (jnp.dot(h.astype(jnp.bfloat16), clsw_ref[...],
                            preferred_element_type=jnp.float32)
                    + clsb_ref[...])                           # (B, 128)


def divita_single_forward(x_bfs, params):
    """x_bfs: (B, F, S) float32 -- same layout the PyTorch module consumes."""
    gamma, beta, w3, cb, clsw, clsb = params
    B, F, S = x_bfs.shape
    C, L = clsw.shape
    LP = 128                                   # lane-padded classifier width

    # glue: NCL -> (B, S, F) -> (B*S, F)
    x2 = jnp.transpose(x_bfs, (0, 2, 1)).reshape(B * S, F).astype(jnp.float32)

    # weight prep (done once per call in XLA, outside the kernel):
    #   stack conv taps along K and cast to bf16; pad the classifier to 128
    #   lanes so the kernel's output store is unmasked / lane-dense.
    w_fused = w3.reshape(3 * F, C).astype(jnp.bfloat16)        # (3F, C)
    clsw_p = jnp.zeros((C, LP), jnp.bfloat16).at[:, :L].set(
        clsw.astype(jnp.bfloat16))
    clsb_p = jnp.zeros((1, LP), jnp.float32).at[:, :L].set(
        clsb.astype(jnp.float32))

    kernel = functools.partial(_divita_conv_kernel, B, S)
    vmem = pl.BlockSpec(memory_space=pltpu.MemorySpace.VMEM)
    out = pl.pallas_call(
        kernel,
        out_shape=jax.ShapeDtypeStruct((B, LP), jnp.float32),
        in_specs=[vmem] * 7,
        out_specs=vmem,
    )(x2, gamma, beta, w_fused, cb, clsw_p, clsb_p)
    return out[:, :L]


def reference_forward(x_bfs, params):
    """Pure-JAX mirror of the PyTorch forward (for validation only)."""
    gamma, beta, w3, cb, clsw, clsb = params
    B, F, S = x_bfs.shape
    x = x_bfs.astype(jnp.float32)
    mean = jnp.mean(x, axis=(0, 2), keepdims=True)
    var = jnp.mean((x - mean) ** 2, axis=(0, 2), keepdims=True)
    xn = (x - mean) / jnp.sqrt(var + 1e-5) * gamma.reshape(1, F, 1) \
        + beta.reshape(1, F, 1)
    w_oik = jnp.transpose(w3, (2, 1, 0))            # (C, F, 3) torch layout
    y = lax.conv_general_dilated(
        xn, w_oik, window_strides=(1,), padding=((1, 1),),
        dimension_numbers=('NCH', 'OIH', 'NCH')) + cb.reshape(1, -1, 1)
    y = jnp.maximum(y, 0.0)
    h = jnp.mean(y, axis=2)                         # (B, C)
    return h @ clsw + clsb


def make_params(key, F, C, L):
    k1, k2, k3, k4, k5, k6 = jax.random.split(key, 6)
    gamma = 1.0 + 0.1 * jax.random.normal(k1, (1, F), jnp.float32)
    beta = 0.1 * jax.random.normal(k2, (1, F), jnp.float32)
    w3 = 0.1 * jax.random.normal(k3, (3, F, C), jnp.float32)   # taps, (F,C) each
    cb = 0.1 * jax.random.normal(k4, (1, C), jnp.float32)
    clsw = 0.1 * jax.random.normal(k5, (C, L), jnp.float32)
    clsb = 0.1 * jax.random.normal(k6, (1, L), jnp.float32)
    return gamma, beta, w3, cb, clsw, clsb


if __name__ == "__main__":
    B, F, S = 2, 8, 16          # batch, num_features, seq len
    C, L = 128, 10              # cam='conv' out_features, num_classes

    root = jax.random.PRNGKey(0)
    kx, kp = jax.random.split(root)
    x = jax.random.normal(kx, (B, F, S), jnp.float32)   # PyTorch NCL input
    params = make_params(kp, F, C, L)

    out = divita_single_forward(x, params)
    out = jax.block_until_ready(out)

    ref = reference_forward(x, params)
    assert out.shape == (B, L), out.shape
    assert bool(jnp.allclose(out, ref, rtol=1e-2, atol=1e-2)), (
        "mismatch vs reference")
    print("KERNEL_OK")
</pallas_src>

<mosaic_0001>
module attributes {stable_mosaic.version = 11 : i64} {
  func.func @_divita_conv_kernel(%arg0: memref<32x8xf32, #tpu.memory_space<vmem>>, %arg1: memref<1x8xf32, #tpu.memory_space<vmem>>, %arg2: memref<1x8xf32, #tpu.memory_space<vmem>>, %arg3: memref<24x128xbf16, #tpu.memory_space<vmem>>, %arg4: memref<1x128xf32, #tpu.memory_space<vmem>>, %arg5: memref<128x128xbf16, #tpu.memory_space<vmem>>, %arg6: memref<1x128xf32, #tpu.memory_space<vmem>>, %arg7: memref<2x128xf32, #tpu.memory_space<vmem>>) attributes {dimension_semantics = [], scalar_prefetch = 0 : i64, scratch_operands = 0 : i64, tpu.core_type = #tpu.core_type<tc>} {
    %c0 = arith.constant 0 : index
    %c0_0 = arith.constant 0 : index
    %0 = vector.load %arg0[%c0, %c0_0] : memref<32x8xf32, #tpu.memory_space<vmem>>, vector<32x8xf32>
    %cst = arith.constant dense<0.000000e+00> : vector<8xf32>
    %1 = vector.multi_reduction <add>, %0, %cst [0] : vector<32x8xf32> to vector<8xf32>
    %2 = vector.shape_cast %1 : vector<8xf32> to vector<1x8xf32>
    %cst_1 = arith.constant 3.200000e+01 : f32
    %3 = vector.broadcast %cst_1 : f32 to vector<1x8xf32>
    %4 = arith.divf %2, %3 : vector<1x8xf32>
    %5 = vector.broadcast %4 : vector<1x8xf32> to vector<32x8xf32>
    %6 = arith.subf %0, %5 : vector<32x8xf32>
    %7 = arith.mulf %6, %6 : vector<32x8xf32>
    %cst_2 = arith.constant dense<0.000000e+00> : vector<8xf32>
    %8 = vector.multi_reduction <add>, %7, %cst_2 [0] : vector<32x8xf32> to vector<8xf32>
    %9 = vector.shape_cast %8 : vector<8xf32> to vector<1x8xf32>
    %cst_3 = arith.constant 3.200000e+01 : f32
    %10 = vector.broadcast %cst_3 : f32 to vector<1x8xf32>
    %11 = arith.divf %9, %10 : vector<1x8xf32>
    %cst_4 = arith.constant 9.99999974E-6 : f32
    %12 = vector.broadcast %cst_4 : f32 to vector<1x8xf32>
    %13 = arith.addf %11, %12 : vector<1x8xf32>
    %14 = math.rsqrt %13 : vector<1x8xf32>
    %15 = vector.broadcast %4 : vector<1x8xf32> to vector<32x8xf32>
    %16 = arith.subf %0, %15 : vector<32x8xf32>
    %17 = vector.broadcast %14 : vector<1x8xf32> to vector<32x8xf32>
    %18 = arith.mulf %16, %17 : vector<32x8xf32>
    %c0_5 = arith.constant 0 : index
    %c0_6 = arith.constant 0 : index
    %19 = vector.load %arg1[%c0_5, %c0_6] : memref<1x8xf32, #tpu.memory_space<vmem>>, vector<1x8xf32>
    %20 = vector.broadcast %19 : vector<1x8xf32> to vector<32x8xf32>
    %21 = arith.mulf %18, %20 : vector<32x8xf32>
    %c0_7 = arith.constant 0 : index
    %c0_8 = arith.constant 0 : index
    %22 = vector.load %arg2[%c0_7, %c0_8] : memref<1x8xf32, #tpu.memory_space<vmem>>, vector<1x8xf32>
    %23 = vector.broadcast %22 : vector<1x8xf32> to vector<32x8xf32>
    %24 = arith.addf %21, %23 : vector<32x8xf32>
    %25 = tpu.iota {dimensions = array<i32: 0>} : vector<32x8xi32>
    %c16_i32 = arith.constant 16 : i32
    %c0_i32 = arith.constant 0 : i32
    %26 = arith.cmpi eq, %c16_i32, %c0_i32 : i32
    %c1_i32 = arith.constant 1 : i32
    %27 = arith.select %26, %c1_i32, %c16_i32 : i32
    %28 = vector.broadcast %27 : i32 to vector<32x8xi32>
    %29 = arith.remsi %25, %28 : vector<32x8xi32>
    %c0_i32_9 = arith.constant 0 : i32
    %30 = vector.broadcast %c0_i32_9 : i32 to vector<32x8xi32>
    %31 = arith.cmpi ne, %29, %30 : vector<32x8xi32>
    %c0_i32_10 = arith.constant 0 : i32
    %32 = vector.broadcast %c0_i32_10 : i32 to vector<32x8xi32>
    %33 = arith.cmpi slt, %29, %32 : vector<32x8xi32>
    %c0_i32_11 = arith.constant 0 : i32
    %34 = arith.cmpi slt, %27, %c0_i32_11 : i32
    %35 = vector.broadcast %34 : i1 to vector<32x8xi1>
    %36 = vector.broadcast %35 : vector<32x8xi1> to vector<32x8xi1>
    %37 = arith.xori %33, %36 : vector<32x8xi1>
    %38 = arith.andi %37, %31 : vector<32x8xi1>
    %39 = vector.broadcast %27 : i32 to vector<32x8xi32>
    %40 = arith.addi %29, %39 : vector<32x8xi32>
    %41 = arith.select %38, %40, %29 : vector<32x8xi1>, vector<32x8xi32>
    %c0_i32_12 = arith.constant 0 : i32
    %42 = vector.broadcast %c0_i32_12 : i32 to vector<32x8xi32>
    %43 = arith.cmpi eq, %41, %42 : vector<32x8xi32>
    %44 = vector.extract_strided_slice %24 {offsets = [31, 0], sizes = [1, 8], strides = [1, 1]} : vector<32x8xf32> to vector<1x8xf32>
    %45 = vector.extract_strided_slice %24 {offsets = [0, 0], sizes = [31, 8], strides = [1, 1]} : vector<32x8xf32> to vector<31x8xf32>
    %46 = tpu.concatenate %44, %45 in 0 : vector<1x8xf32>, vector<31x8xf32> -> vector<32x8xf32>
    %cst_13 = arith.constant 0.000000e+00 : f32
    %47 = vector.broadcast %cst_13 : f32 to vector<32x8xf32>
    %48 = arith.select %43, %47, %46 : vector<32x8xi1>, vector<32x8xf32>
    %c16_i32_14 = arith.constant 16 : i32
    %c0_i32_15 = arith.constant 0 : i32
    %49 = arith.cmpi eq, %c16_i32_14, %c0_i32_15 : i32
    %c1_i32_16 = arith.constant 1 : i32
    %50 = arith.select %49, %c1_i32_16, %c16_i32_14 : i32
    %51 = vector.broadcast %50 : i32 to vector<32x8xi32>
    %52 = arith.remsi %25, %51 : vector<32x8xi32>
    %c0_i32_17 = arith.constant 0 : i32
    %53 = vector.broadcast %c0_i32_17 : i32 to vector<32x8xi32>
    %54 = arith.cmpi ne, %52, %53 : vector<32x8xi32>
    %c0_i32_18 = arith.constant 0 : i32
    %55 = vector.broadcast %c0_i32_18 : i32 to vector<32x8xi32>
    %56 = arith.cmpi slt, %52, %55 : vector<32x8xi32>
    %c0_i32_19 = arith.constant 0 : i32
    %57 = arith.cmpi slt, %50, %c0_i32_19 : i32
    %58 = vector.broadcast %57 : i1 to vector<32x8xi1>
    %59 = vector.broadcast %58 : vector<32x8xi1> to vector<32x8xi1>
    %60 = arith.xori %56, %59 : vector<32x8xi1>
    %61 = arith.andi %60, %54 : vector<32x8xi1>
    %62 = vector.broadcast %50 : i32 to vector<32x8xi32>
    %63 = arith.addi %52, %62 : vector<32x8xi32>
    %64 = arith.select %61, %63, %52 : vector<32x8xi1>, vector<32x8xi32>
    %c15_i32 = arith.constant 15 : i32
    %65 = vector.broadcast %c15_i32 : i32 to vector<32x8xi32>
    %66 = arith.cmpi eq, %64, %65 : vector<32x8xi32>
    %67 = vector.extract_strided_slice %24 {offsets = [1, 0], sizes = [31, 8], strides = [1, 1]} : vector<32x8xf32> to vector<31x8xf32>
    %68 = vector.extract_strided_slice %24 {offsets = [0, 0], sizes = [1, 8], strides = [1, 1]} : vector<32x8xf32> to vector<1x8xf32>
    %69 = tpu.concatenate %67, %68 in 0 : vector<31x8xf32>, vector<1x8xf32> -> vector<32x8xf32>
    %cst_20 = arith.constant 0.000000e+00 : f32
    %70 = vector.broadcast %cst_20 : f32 to vector<32x8xf32>
    %71 = arith.select %66, %70, %69 : vector<32x8xi1>, vector<32x8xf32>
    %72 = tpu.concatenate %48, %24, %71 in 1 : vector<32x8xf32>, vector<32x8xf32>, vector<32x8xf32> -> vector<32x24xf32>
    %73 = arith.truncf %72 : vector<32x24xf32> to vector<32x24xbf16>
    %c0_21 = arith.constant 0 : index
    %c0_22 = arith.constant 0 : index
    %74 = vector.load %arg3[%c0_21, %c0_22] : memref<24x128xbf16, #tpu.memory_space<vmem>>, vector<24x128xbf16>
    %cst_23 = arith.constant dense<0.000000e+00> : vector<32x128xf32>
    %75 = tpu.matmul %73, %74, %cst_23 {dimension_numbers = #tpu.dot_dimension_numbers<[1], [0], [0], [1], [0, 0, 1, 1], [], []>} : vector<32x24xbf16>, vector<24x128xbf16>, vector<32x128xf32> -> vector<32x128xf32>
    %c0_24 = arith.constant 0 : index
    %c0_25 = arith.constant 0 : index
    %76 = vector.load %arg4[%c0_24, %c0_25] : memref<1x128xf32, #tpu.memory_space<vmem>>, vector<1x128xf32>
    %77 = vector.broadcast %76 : vector<1x128xf32> to vector<32x128xf32>
    %78 = arith.addf %75, %77 : vector<32x128xf32>
    %cst_26 = arith.constant 0.000000e+00 : f32
    %79 = vector.broadcast %cst_26 : f32 to vector<32x128xf32>
    %80 = arith.maximumf %78, %79 : vector<32x128xf32>
    %81 = vector.shape_cast %80 : vector<32x128xf32> to vector<2x16x128xf32>
    %cst_27 = arith.constant dense<0.000000e+00> : vector<2x128xf32>
    %82 = vector.multi_reduction <add>, %81, %cst_27 [1] : vector<2x16x128xf32> to vector<2x128xf32>
    %cst_28 = arith.constant 1.600000e+01 : f32
    %83 = vector.broadcast %cst_28 : f32 to vector<2x128xf32>
    %84 = arith.divf %82, %83 : vector<2x128xf32>
    %85 = arith.truncf %84 : vector<2x128xf32> to vector<2x128xbf16>
    %c0_29 = arith.constant 0 : index
    %c0_30 = arith.constant 0 : index
    %86 = vector.load %arg5[%c0_29, %c0_30] : memref<128x128xbf16, #tpu.memory_space<vmem>>, vector<128x128xbf16>
    %cst_31 = arith.constant dense<0.000000e+00> : vector<2x128xf32>
    %87 = tpu.matmul %85, %86, %cst_31 {dimension_numbers = #tpu.dot_dimension_numbers<[1], [0], [0], [1], [0, 0, 1, 1], [], []>} : vector<2x128xbf16>, vector<128x128xbf16>, vector<2x128xf32> -> vector<2x128xf32>
    %c0_32 = arith.constant 0 : index
    %c0_33 = arith.constant 0 : index
    %88 = vector.load %arg6[%c0_32, %c0_33] : memref<1x128xf32, #tpu.memory_space<vmem>>, vector<1x128xf32>
    %89 = vector.broadcast %88 : vector<1x128xf32> to vector<2x128xf32>
    %90 = arith.addf %87, %89 : vector<2x128xf32>
    %c0_34 = arith.constant 0 : index
    %c0_35 = arith.constant 0 : index
    %91 = vector.load %arg7[%c0_34, %c0_35] : memref<2x128xf32, #tpu.memory_space<vmem>>, vector<2x128xf32>
    tpu.vector_store %arg7[%c0_34, %c0_35], %90 {strides = array<i32>} : memref<2x128xf32, #tpu.memory_space<vmem>>, vector<2x128xf32>,
    return
  }
}

</mosaic_0001>

<llo_original>
// kernel: tpu_custom_call.1
$region0: #{tpu_custom_call.1}
  #allocation0 [shape = 'u32[]', space=smem, size = 0x4, offset = 0x4, fixed_abs, tag = 'smem constant byte address 0x4 - core index']
  #allocation1 [shape = 'u32[144,128]{1,0:T(1,128)}', space=vmem, size = 0x12000, scoped, tag = 'internal scratch']
  %s0 = inlined_call_operand.vmem [shape: f32[32,8], index: 0, kind: input, shape index: {}]
  %s1 = inlined_call_operand.vmem [shape: f32[1,8], index: 1, kind: input, shape index: {}]
  %s2 = inlined_call_operand.vmem [shape: f32[1,8], index: 2, kind: input, shape index: {}]
  %s3 = inlined_call_operand.vmem [shape: bf16[24,128], index: 3, kind: input, shape index: {}]
  %s4 = inlined_call_operand.vmem [shape: f32[1,128], index: 4, kind: input, shape index: {}]
  %s5 = inlined_call_operand.hbm [shape: bf16[128,128], index: 5, kind: input, shape index: {}]
  %s6 = inlined_call_operand.vmem [shape: f32[1,128], index: 6, kind: input, shape index: {}]
  %s7 = inlined_call_operand.hbm [shape: f32[2,128], index: 7, kind: output, shape index: {}]
  %s8 = sld [smem:[#allocation0]]
  $region42: #{tpu_custom_call.1} parent=0
    _
  %s10 = ssub.s32 1, %s8
  %s11 = scalar_select 0, %s10, %s8
  $region1: #{tpu_custom_call.1} parent=0
    #allocation2 [shape = 'u8[32768]{0}', space=vmem, size = 0x8000, scoped, tag = 'input window, operand 5, single buffered']
    #allocation3 [shape = 's32[1]{0}', space=sflag, size = 0x4, scoped, tag = 'scoped memory for tpu_custom_call.1']
    #allocation4 [shape = 's32[1]{0}', space=sflag, size = 0x4, scoped, tag = 'scoped memory for tpu_custom_call.1']
    #allocation5 [shape = 'u8[1024]{0}', space=vmem, size = 0x400, scoped, tag = 'output window, operand 0, single buffered']
    %12 = vsyncpa [#allocation3], 0
    %13 = vsyncpa [#allocation4], 0
    // Predicated region
    $region2: #{tpu_custom_call.1} parent=1 // pred_check
      _
    $region3: #{tpu_custom_call.1} parent=1 // pred_check_branch
      %15 = sbr.rel (0) target = $region5
    $region4: #{tpu_custom_call.1} parent=1 // pred_region
      _
    $region5: #{tpu_custom_call.1} parent=1 // pred_fallthru
      _
    // Predicated region
    $region6: #{tpu_custom_call.1} parent=1 // pred_check
      _
    $region7: #{tpu_custom_call.1} parent=1 // pred_check_branch
      %17 = sbr.rel (0) target = $region9
    $region8: #{tpu_custom_call.1} parent=1 // pred_region
      _
    $region9: #{tpu_custom_call.1} parent=1 // pred_fallthru
      _
    // Predicated region
    $region10: #{tpu_custom_call.1} parent=1 // pred_check
      _
    $region11: #{tpu_custom_call.1} parent=1 // pred_check_branch
      %19 = sbr.rel (0) target = $region13
    $region12: #{tpu_custom_call.1} parent=1 // pred_region
      _
    $region13: #{tpu_custom_call.1} parent=1 // pred_fallthru
      _
    // Predicated region
    $region14: #{tpu_custom_call.1} parent=1 // pred_check
      _
    $region15: #{tpu_custom_call.1} parent=1 // pred_check_branch
      %21 = sbr.rel (0) target = $region17
    $region16: #{tpu_custom_call.1} parent=1 // pred_region
      _
    $region17: #{tpu_custom_call.1} parent=1 // pred_fallthru
      _
    // Predicated region
    $region18: #{tpu_custom_call.1} parent=1 // pred_check
      _
    $region19: #{tpu_custom_call.1} parent=1 // pred_check_branch
      %23 = sbr.rel (0) target = $region21
    $region20: #{tpu_custom_call.1} parent=1 // pred_region
      _
    $region21: #{tpu_custom_call.1} parent=1 // pred_fallthru
      _
    // Predicated region
    $region22: #{tpu_custom_call.1} parent=1 // pred_check
      _
    $region23: #{tpu_custom_call.1} parent=1 // pred_check_branch
      %25 = sbr.rel (0) target = $region25
    $region24: #{tpu_custom_call.1} parent=1 // pred_region
      %s27 = ssub.s32 1024, 1024
      %28 = vsyncadd [#allocation3], %s27
      %s29 = sshll.u32 [#allocation2], 4
      %s30 = int_to_ptr.vmem [resolvable:$true] %s29
      %35 = dma.hbm_to_vmem [thread:$0]  %s5, 1024, %s30, [#allocation3], 64, 64, 4
    $region25: #{tpu_custom_call.1} parent=1 // pred_fallthru
      _
    // Predicated region
    $region26: #{tpu_custom_call.1} parent=1 // pred_check
      _
    $region27: #{tpu_custom_call.1} parent=1 // pred_check_branch
      %37 = sbr.rel (0) target = $region29
    $region28: #{tpu_custom_call.1} parent=1 // pred_region
      _
    $region29: #{tpu_custom_call.1} parent=1 // pred_fallthru
      _
    // Predicated region
    $region30: #{tpu_custom_call.1} parent=1 // pred_check
      _
    $region31: #{tpu_custom_call.1} parent=1 // pred_check_branch
      %39 = sbr.rel (0) target = $region33
    $region32: #{tpu_custom_call.1} parent=1 // pred_region
      %40 = dma.done [#allocation3], 1024
    $region33: #{tpu_custom_call.1} parent=1 // pred_fallthru
      _
    %v42 = vld [vmem:[%s0] sm:$0xff]
    %v43 = vld [vmem:[%s0 + $0x8] sm:$0xff]
    %v44 = vld [vmem:[%s0 + $0x10] sm:$0xff]
    %v45 = vld [vmem:[%s0 + $0x18] sm:$0xff]
    %vm46 = vcmask 64512
    %v47 = vsel %vm46, %v42, 0.0
    %v48 = vsel %vm46, %v43, 0.0
    %v49 = vadd.f32 %v47, %v48
    %v50 = vsel %vm46, %v44, 0.0
    %v51 = vadd.f32 %v49, %v50
    %v52 = vsel %vm46, %v45, 0.0
    %v53 = vadd.f32 %v51, %v52
    %v54 = vrot.slane %v53, 4
    %v55 = vadd.f32 %v53, %v54
    %v56 = vrot.slane %v55, 2
    %v57 = vadd.f32 %v55, %v56
    %v58 = vrot.slane %v57, 1
    %v59 = vadd.f32 %v57, %v58
    %v60 = vrcp.pop 32.0
    %v61 = vmul.f32 %v59, %v60
    %v62 = vsub.f32 %v42, %v61
    %v63 = vsub.f32 %v43, %v61
    %v64 = vsub.f32 %v44, %v61
    %v65 = vsub.f32 %v45, %v61
    %v66 = vmul.f32 %v62, %v62
    %v67 = vmul.f32 %v63, %v63
    %v68 = vmul.f32 %v64, %v64
    %v69 = vmul.f32 %v65, %v65
    %v70 = vsel %vm46, %v66, 0.0
    %v71 = vsel %vm46, %v67, 0.0
    %v72 = vadd.f32 %v70, %v71
    %v73 = vsel %vm46, %v68, 0.0
    %v74 = vadd.f32 %v72, %v73
    %v75 = vsel %vm46, %v69, 0.0
    %v76 = vadd.f32 %v74, %v75
    %v77 = vrot.slane %v76, 4
    %v78 = vadd.f32 %v76, %v77
    %v79 = vrot.slane %v78, 2
    %v80 = vadd.f32 %v78, %v79
    %v81 = vrot.slane %v80, 1
    %v82 = vadd.f32 %v80, %v81
    %v83 = vmul.f32 %v82, %v60
    %v84 = vadd.f32 %v83, 1e-05
    %v85 = vrsqrt.pop %v84
    %v86 = vmul.f32 %v62, %v85
    %v87 = vmul.f32 %v63, %v85
    %v88 = vmul.f32 %v64, %v85
    %v89 = vmul.f32 %v65, %v85
    %v90 = vld [vmem:[%s1] sm:$0x1]
    %v92 = vlaneseq
    %v93 = vshrl.u32 %v92, 7
    %v94 = vsub.s32 0, %v93
    %v95 = vrot.slane %v90, %v94
    %v97 = vmul.f32 %v86, %v95
    %v98 = vmul.f32 %v87, %v95
    %v99 = vmul.f32 %v88, %v95
    %v100 = vmul.f32 %v89, %v95
    %v101 = vld [vmem:[%s2] sm:$0x1]
    %v103 = vlaneseq
    %v104 = vshrl.u32 %v103, 7
    %v105 = vsub.s32 0, %v104
    %v106 = vrot.slane %v101, %v105
    %v108 = vadd.f32 %v97, %v106
    %v109 = vadd.f32 %v98, %v106
    %v110 = vadd.f32 %v99, %v106
    %v111 = vadd.f32 %v100, %v106
    %v112 = vlaneseq
    %v113 = vshrl.u32 %v112, 7
    %v114 = vadd.s32 %v113, 8
    %v115 = vadd.s32 %v113, 16
    %v116 = vadd.s32 %v113, 24
    %vm117 = vcmp.lt.s32.totalorder %v113, 0
    %v118 = vsub.s32 0, %v113
    %v119 = vsel %vm117, %v118, %v113
    %v120 = vshrl.u32 %v119, 4
    %v121 = vand.u32 %v119, 15
    %v122 = vsub.s32 0, %v121
    %v123 = vsel %vm117, %v122, %v121
    %vm124 = vcmp.lt.s32.totalorder %v114, 0
    %v125 = vsub.s32 0, %v114
    %v126 = vsel %vm124, %v125, %v114
    %v127 = vshrl.u32 %v126, 4
    %v128 = vand.u32 %v126, 15
    %v129 = vsub.s32 0, %v128
    %v130 = vsel %vm124, %v129, %v128
    %vm131 = vcmp.lt.s32.totalorder %v115, 0
    %v132 = vsub.s32 0, %v115
    %v133 = vsel %vm131, %v132, %v115
    %v134 = vshrl.u32 %v133, 4
    %v135 = vand.u32 %v133, 15
    %v136 = vsub.s32 0, %v135
    %v137 = vsel %vm131, %v136, %v135
    %vm138 = vcmp.lt.s32.totalorder %v116, 0
    %v139 = vsub.s32 0, %v116
    %v140 = vsel %vm138, %v139, %v116
    %v141 = vshrl.u32 %v140, 4
    %v142 = vand.u32 %v140, 15
    %v143 = vsub.s32 0, %v142
    %v144 = vsel %vm138, %v143, %v142
    %vm145 = vcmp.ne.s32.totalorder %v123, 0
    %vm146 = vcmp.ne.s32.totalorder %v130, 0
    %vm147 = vcmp.ne.s32.totalorder %v137, 0
    %vm148 = vcmp.ne.s32.totalorder %v144, 0
    %vm149 = vcmp.lt.s32.totalorder %v123, 0
    %vm150 = vcmp.lt.s32.totalorder %v130, 0
    %vm151 = vcmp.lt.s32.totalorder %v137, 0
    %vm152 = vcmp.lt.s32.totalorder %v144, 0
    %vm153 = vmand %vm149, %vm145
    %vm154 = vmand %vm150, %vm146
    %vm155 = vmand %vm151, %vm147
    %vm156 = vmand %vm152, %vm148
    %v157 = vadd.s32 %v123, 16
    %v158 = vadd.s32 %v130, 16
    %v159 = vadd.s32 %v137, 16
    %v160 = vadd.s32 %v144, 16
    %v161 = vsel %vm153, %v157, %v123
    %v162 = vsel %vm154, %v158, %v130
    %v163 = vsel %vm155, %v159, %v137
    %v164 = vsel %vm156, %v160, %v144
    %vm165 = vcmp.eq.s32.totalorder %v161, 0
    %vm166 = vcmp.eq.s32.totalorder %v162, 0
    %vm167 = vcmp.eq.s32.totalorder %v163, 0
    %vm168 = vcmp.eq.s32.totalorder %v164, 0
    %v170 = vrot.slane %v111, 7
    %vm175 = vcmask 1040384
    %v176 = vrot.slane %v108, 7
    %v177 = vrot.slane %v109, 7
    %v178 = vsel %vm175, %v176, %v177
    %v179 = vrot.slane %v110, 7
    %v180 = vsel %vm175, %v177, %v179
    %v181 = vsel %vm175, %v179, %v170
    %v186 = vsel %vm175, %v170, %v176
    %v187 = vsel %vm165, 0.0, %v186
    %v188 = vsel %vm166, 0.0, %v178
    %v189 = vsel %vm167, 0.0, %v180
    %v190 = vsel %vm168, 0.0, %v181
    %vm191 = vcmp.eq.s32.totalorder %v161, 15
    %vm192 = vcmp.eq.s32.totalorder %v162, 15
    %vm193 = vcmp.eq.s32.totalorder %v163, 15
    %vm194 = vcmp.eq.s32.totalorder %v164, 15
    %vm195 = vcmask 1046528
    %v196 = vrot.slane %v108, 1
    %v197 = vrot.slane %v109, 1
    %v198 = vsel %vm195, %v196, %v197
    %v199 = vrot.slane %v110, 1
    %v200 = vsel %vm195, %v197, %v199
    %v201 = vrot.slane %v111, 1
    %v202 = vsel %vm195, %v199, %v201
    %v208 = vsel %vm195, %v201, %v196
    %v209 = vsel %vm191, 0.0, %v198
    %v210 = vsel %vm192, 0.0, %v200
    %v211 = vsel %vm193, 0.0, %v202
    %v212 = vsel %vm194, 0.0, %v208
    %213 = vrot.lane.b32.xlu0 %v108, 8
    %v214 = vpop.permute.xlu0 %213
    %215 = vrot.lane.b32.xlu0 %v109, 8
    %v216 = vpop.permute.xlu0 %215
    %217 = vrot.lane.b32.xlu0 %v110, 8
    %v218 = vpop.permute.xlu0 %217
    %219 = vrot.lane.b32.xlu0 %v111, 8
    %v220 = vpop.permute.xlu0 %219
    %229 = vrot.lane.b32.xlu0 %v209, 16
    %v230 = vpop.permute.xlu0 %229
    %231 = vrot.lane.b32.xlu0 %v210, 16
    %v232 = vpop.permute.xlu0 %231
    %233 = vrot.lane.b32.xlu0 %v211, 16
    %v234 = vpop.permute.xlu0 %233
    %235 = vrot.lane.b32.xlu0 %v212, 16
    %v236 = vpop.permute.xlu0 %235
    %v241 = vsel %vm46, %v187, %v214
    %v242 = vsel %vm46, %v188, %v216
    %v243 = vsel %vm46, %v189, %v218
    %v244 = vsel %vm46, %v190, %v220
    %vm245 = vcmask 130048
    %v246 = vsel %vm245, %v241, %v230
    %v247 = vsel %vm245, %v242, %v232
    %v248 = vsel %vm245, %v243, %v234
    %v249 = vsel %vm245, %v244, %v236
    %v250 = vpack.c.bf16 %v247, %v246
    %v251 = vpack.c.bf16 %v249, %v248
    %v252 = vld [vmem:[%s3] sm:$0xf]
    %v253 = vld [vmem:[%s3 + $0x4] sm:$0xf]
    %v254 = vld [vmem:[%s3 + $0x8] sm:$0xf]
    %v255 = vld [vmem:[%s4] sm:$0x1]
    %v257 = vlaneseq
    %v258 = vshrl.u32 %v257, 7
    %v259 = vsub.s32 0, %v258
    %v260 = vrot.slane %v255, %v259
    %v265 = vunpack.c.l.b16 %v252
    %v266 = vunpack.c.l.b16 %v253
    %v267 = vunpack.c.l.b16 %v254
    %v268 = vpack.c.b16 %v266, %v265
    %v269 = vpack.c.b16 %v267, %v267
    %vm271 = vcmask 195584
    %v273 = vsel %vm271, %v250, 0
    %v276 = vsel %vm271, %v251, 0
    %vm278 = vcmask 1043456
    %v280 = vsel %vm278, %v269, 0
    %282 = vmatprep.subr.bf16.mxu0 0
    %283 = vmatpush1.bf16.msra.mxu0 %v268
    %284 = vmatprep.subr.bf16.mxu0 0
    %285 = vmatpush1.bf16.msra.mxu0 %v280
    %286 = vmatprep.subr.bf16.mxu0 0
    %287 = vmatpush1.bf16.msra.mxu0 0
    %288 = vmatprep.subr.bf16.mxu0 0
    %289 = vmatpush1.bf16.msra.mxu0 0
    %290 = vmatprep.subr.bf16.mxu0 0
    %291 = vmatpush1.bf16.msra.mxu0 0
    %292 = vmatprep.subr.bf16.mxu0 0
    %293 = vmatpush1.bf16.msra.mxu0 0
    %294 = vmatprep.subr.bf16.mxu0 0
    %295 = vmatpush1.bf16.msra.mxu0 0
    %296 = vmatprep.subr.bf16.mxu0 0
    %297 = vmatpush1.bf16.msra.mxu0 0
    %298 = vmatprep.subr.bf16.mxu0 0
    %299 = vmatpush1.bf16.msra.mxu0 0
    %300 = vmatprep.subr.bf16.mxu0 0
    %301 = vmatpush1.bf16.msra.mxu0 0
    %302 = vmatprep.subr.bf16.mxu0 0
    %303 = vmatpush1.bf16.msra.mxu0 0
    %304 = vmatprep.subr.bf16.mxu0 0
    %305 = vmatpush1.bf16.msra.mxu0 0
    %306 = vmatprep.subr.bf16.mxu0 0
    %307 = vmatpush1.bf16.msra.mxu0 0
    %308 = vmatprep.subr.bf16.mxu0 0
    %309 = vmatpush1.bf16.msra.mxu0 0
    %310 = vmatprep.subr.bf16.mxu0 0
    %311 = vmatpush1.bf16.msra.mxu0 0
    %312 = vmatprep.subr.bf16.mxu0 0
    %313 = vmatpush1.bf16.msra.mxu0 0
    %314 = vmatprep.mubr.bf16.mxu0 0
    %315 = vmatmul.mubr.bf16.gmra.mrb[0].mxu0 %v273
    %v316 = vpop.f32.mrb[0].mxu0
    %v317 = vadd.f32 %v260, %v316
    %v318 = vpop.f32.mrb[0].mxu0
    %v319 = vpop.f32.mrb[0].mxu0
    %v320 = vadd.f32 %v260, %v319
    %v321 = vpop.f32.mrb[0].mxu0
    %322 = vmatprep.mubr.bf16.mxu0 0
    %323 = vmatmul.mubr.bf16.gmra.mrb[0].mxu0 %v276
    %v324 = vpop.f32.mrb[0].mxu0
    %v325 = vadd.f32 %v260, %v324
    %v326 = vpop.f32.mrb[0].mxu0
    %v327 = vpop.f32.mrb[0].mxu0
    %v328 = vadd.f32 %v260, %v327
    %v329 = vpop.f32.mrb[0].mxu0
    %330 = vdwg.mxu0
    %v331 = vmax.f32 %v317, 0.0
    %v332 = vmax.f32 %v320, 0.0
    %v333 = vmax.f32 %v325, 0.0
    %v334 = vmax.f32 %v328, 0.0
    %v335 = vadd.f32 %v331, %v332
    %v336 = vrot.slane %v335, 4
    %v337 = vadd.f32 %v335, %v336
    %v338 = vrot.slane %v337, 2
    %v339 = vadd.f32 %v337, %v338
    %v340 = vrot.slane %v339, 1
    %v341 = vadd.f32 %v339, %v340
    %v342 = vadd.f32 %v333, %v334
    %v343 = vrot.slane %v342, 4
    %v344 = vadd.f32 %v342, %v343
    %v345 = vrot.slane %v344, 2
    %v346 = vadd.f32 %v344, %v345
    %v347 = vrot.slane %v346, 1
    %v348 = vadd.f32 %v346, %v347
    %v349 = vrcp.pop 16.0
    %v350 = vmul.f32 %v341, %v349
    %v351 = vmul.f32 %v348, %v349
    %v352 = vpack.c.bf16 %v350, %v350
    %v353 = vpack.c.bf16 %v351, %v351
    %v354 = vld [vmem:[#allocation2] sm:$0xf]
    %v355 = vld [vmem:[#allocation2 + $0x4] sm:$0xf]
    %v356 = vld [vmem:[#allocation2 + $0x8] sm:$0xf]
    %v357 = vld [vmem:[#allocation2 + $0xc] sm:$0xf]
    %v358 = vld [vmem:[#allocation2 + $0x10] sm:$0xf]
    %v359 = vld [vmem:[#allocation2 + $0x14] sm:$0xf]
    %v360 = vld [vmem:[#allocation2 + $0x18] sm:$0xf]
    %v361 = vld [vmem:[#allocation2 + $0x1c] sm:$0xf]
    %v362 = vld [vmem:[#allocation2 + $0x20] sm:$0xf]
    %v363 = vld [vmem:[#allocation2 + $0x24] sm:$0xf]
    %v364 = vld [vmem:[#allocation2 + $0x28] sm:$0xf]
    %v365 = vld [vmem:[#allocation2 + $0x2c] sm:$0xf]
    %v366 = vld [vmem:[#allocation2 + $0x30] sm:$0xf]
    %v367 = vld [vmem:[#allocation2 + $0x34] sm:$0xf]
    %v368 = vld [vmem:[#allocation2 + $0x38] sm:$0xf]
    %v369 = vld [vmem:[#allocation2 + $0x3c] sm:$0xf]
    %v370 = vld [vmem:[%s6] sm:$0x1]
    %v372 = vlaneseq
    %v373 = vshrl.u32 %v372, 7
    %v374 = vsub.s32 0, %v373
    %v375 = vrot.slane %v370, %v374
    %v379 = vunpack.c.l.b16 %v352
    %v380 = vunpack.c.l.b16 %v353
    %vm381 = vcmask 1041409
    %v382 = vsel %vm381, %v380, %v379
    %v383 = vpack.c.b16 %v382, %v382
    %v401 = vunpack.c.l.b16 %v354
    %v402 = vunpack.c.l.b16 %v355
    %v403 = vunpack.c.l.b16 %v356
    %v404 = vunpack.c.l.b16 %v357
    %v405 = vunpack.c.l.b16 %v358
    %v406 = vunpack.c.l.b16 %v359
    %v407 = vunpack.c.l.b16 %v360
    %v408 = vunpack.c.l.b16 %v361
    %v409 = vunpack.c.l.b16 %v362
    %v410 = vunpack.c.l.b16 %v363
    %v411 = vunpack.c.l.b16 %v364
    %v412 = vunpack.c.l.b16 %v365
    %v413 = vunpack.c.l.b16 %v366
    %v414 = vunpack.c.l.b16 %v367
    %v415 = vunpack.c.l.b16 %v368
    %v416 = vunpack.c.l.b16 %v369
    %v417 = vpack.c.b16 %v402, %v401
    %v418 = vpack.c.b16 %v404, %v403
    %v419 = vpack.c.b16 %v406, %v405
    %v420 = vpack.c.b16 %v408, %v407
    %v421 = vpack.c.b16 %v410, %v409
    %v422 = vpack.c.b16 %v412, %v411
    %v423 = vpack.c.b16 %v414, %v413
    %v424 = vpack.c.b16 %v416, %v415
    %433 = vmatprep.subr.bf16.mxu0 0
    %434 = vmatpush1.bf16.msra.mxu0 %v417
    %435 = vmatprep.subr.bf16.mxu0 0
    %436 = vmatpush1.bf16.msra.mxu0 %v418
    %437 = vmatprep.subr.bf16.mxu0 0
    %438 = vmatpush1.bf16.msra.mxu0 %v419
    %439 = vmatprep.subr.bf16.mxu0 0
    %440 = vmatpush1.bf16.msra.mxu0 %v420
    %441 = vmatprep.subr.bf16.mxu0 0
    %442 = vmatpush1.bf16.msra.mxu0 %v421
    %443 = vmatprep.subr.bf16.mxu0 0
    %444 = vmatpush1.bf16.msra.mxu0 %v422
    %445 = vmatprep.subr.bf16.mxu0 0
    %446 = vmatpush1.bf16.msra.mxu0 %v423
    %447 = vmatprep.subr.bf16.mxu0 0
    %448 = vmatpush1.bf16.msra.mxu0 %v424
    %449 = vmatprep.subr.bf16.mxu0 0
    %450 = vmatpush1.bf16.msra.mxu0 0
    %451 = vmatprep.subr.bf16.mxu0 0
    %452 = vmatpush1.bf16.msra.mxu0 0
    %453 = vmatprep.subr.bf16.mxu0 0
    %454 = vmatpush1.bf16.msra.mxu0 0
    %455 = vmatprep.subr.bf16.mxu0 0
    %456 = vmatpush1.bf16.msra.mxu0 0
    %457 = vmatprep.subr.bf16.mxu0 0
    %458 = vmatpush1.bf16.msra.mxu0 0
    %459 = vmatprep.subr.bf16.mxu0 0
    %460 = vmatpush1.bf16.msra.mxu0 0
    %461 = vmatprep.subr.bf16.mxu0 0
    %462 = vmatpush1.bf16.msra.mxu0 0
    %463 = vmatprep.subr.bf16.mxu0 0
    %464 = vmatpush1.bf16.msra.mxu0 0
    %465 = vmatprep.mubr.bf16.mxu0 0
    %466 = vmatmul.mubr.bf16.gmra.mrb[0].mxu0 %v383
    %v467 = vpop.f32.mrb[0].mxu0
    %v468 = vadd.f32 %v375, %v467
    %v469 = vpop.f32.mrb[0].mxu0
    %v470 = vpop.f32.mrb[0].mxu0
    %v471 = vpop.f32.mrb[0].mxu0
    %472 = vdwg.mxu0
    %473 = vst [vmem:[#allocation5] sm:$0x3] %v468
    // Predicated region
    $region34: #{tpu_custom_call.1} parent=1 // pred_check
      _
    $region35: #{tpu_custom_call.1} parent=1 // pred_check_branch
      %475 = sbr.rel (0) target = $region37
    $region36: #{tpu_custom_call.1} parent=1 // pred_region
      %s477 = ssub.s32 32, 32
      %478 = vsyncadd [#allocation4], %s477
      %s480 = sshll.u32 [#allocation5], 4
      %s481 = int_to_ptr.vmem [resolvable:$true] %s480
      %483 = dma.vmem_to_hbm [thread:$0]  %s481, 32, %s7, [#allocation4]
    $region37: #{tpu_custom_call.1} parent=1 // pred_fallthru
      _
    // Predicated region
    $region38: #{tpu_custom_call.1} parent=1 // pred_check
      _
    $region39: #{tpu_custom_call.1} parent=1 // pred_check_branch
      %485 = sbr.rel (0) target = $region41
    $region40: #{tpu_custom_call.1} parent=1 // pred_region
      %486 = dma.done [#allocation4], 32
    $region41: #{tpu_custom_call.1} parent=1 // pred_fallthru
      _
    %487 = vsyncpa [#allocation3], 1
    %488 = vsyncpa [#allocation4], 1

</llo_original>
